<compile_context>
chip_gen: v7x
topology: tpu7x:2x2x1
jax: 0.10.0
libtpu: 0.0.40
codegen_flags: <defaults>
</compile_context>

<pallas_src>
import functools

import jax
import jax.numpy as jnp
from jax.experimental import pallas as pl
from jax.experimental.pallas import tpu as pltpu


def autopad(k, p=None):
    if p is None:
        p = k // 2 if isinstance(k, int) else [x // 2 for x in k]
    return p


def _round_up(a, b):
    return -(-a // b) * b


# ---------------- capability probe: single-buffered resident operands ----------------
def _probe_single_buffering():
    """Returns True iff BlockSpec(pipeline_mode=pl.Buffered(1)) compiles and runs."""
    try:
        def _copy(x_ref, o_ref):
            o_ref[...] = x_ref[...]

        spec = pl.BlockSpec((8, 128), lambda i: (0, 0), pipeline_mode=pl.Buffered(1))
        fn = pl.pallas_call(
            _copy,
            out_shape=jax.ShapeDtypeStruct((8, 128), jnp.float32),
            grid=(1,),
            in_specs=[spec],
            out_specs=pl.BlockSpec((8, 128), lambda i: (0, 0)),
        )
        jax.block_until_ready(fn(jnp.zeros((8, 128), jnp.float32)))
        return True
    except Exception:
        return False


_SINGLE_BUFFER_RESIDENT = _probe_single_buffering()


def _resident_spec(shape, index_map):
    """BlockSpec for a grid-invariant operand: one VMEM buffer (no double-buffering)."""
    if _SINGLE_BUFFER_RESIDENT:
        return pl.BlockSpec(shape, index_map, pipeline_mode=pl.Buffered(1))
    return pl.BlockSpec(shape, index_map)


# ----------------------------------- Pallas kernel -----------------------------------
def _conv_bn_silu_kernel(x_ref, w_ref, shift_ref, o_ref, *scratch, taps, tm):
    # x_ref:     (1, Lx, Cin)   bf16  flattened activation (phase-stacked or tap-merged)
    # w_ref:     (T, Cin, C2p)  bf16  BN-scale-folded weight, one (Cin, C2p) slab per tap
    # shift_ref: (1, C2p)       f32   BN shift (beta - mean * scale)
    # o_ref:     (1, tm, C2p)   bf16  activated output rows (lane-dense channels)
    # scratch:   ((tm, C2p) f32 VMEM accumulator,) only when len(taps) > 1
    base = pl.multiple_of(pl.program_id(1) * tm, 8)

    def tap_lhs(off, dxs):
        # `off` is a multiple of 8 by construction (aligned phase/row offsets);
        # only the small dx shift breaks sublane alignment.
        start = pl.multiple_of(base + off, 8) + dxs
        return x_ref[0, pl.ds(start, tm), :]

    if len(taps) == 1:                                  # merged-tap path: one MXU dot
        off, dxs = taps[0]
        acc = jnp.dot(tap_lhs(off, dxs), w_ref[0], preferred_element_type=jnp.float32)
    else:                                               # tap-loop path: VMEM accumulator
        acc_ref = scratch[0]
        for t, (off, dxs) in enumerate(taps):
            contrib = jnp.dot(tap_lhs(off, dxs), w_ref[t],
                              preferred_element_type=jnp.float32)
            if t == 0:
                acc_ref[...] = contrib
            else:
                acc_ref[...] += contrib
        acc = acc_ref[...]

    y = acc + shift_ref[...]                            # fused BN (scale folded into W)
    sig = pl.reciprocal(1.0 + jnp.exp(-y), approx=True)  # EUP exp + approx reciprocal
    o_ref[0, :, :] = (y * sig).astype(o_ref.dtype)      # SiLU, bf16 store


def _fused_conv_bn_silu(xf, w_taps, shift_p, *, taps, tm, n_m):
    # xf: (N, Lx, Cin) bf16 ; w_taps: (T, Cin, C2p) bf16 ; shift_p: (1, C2p) f32
    N, Lx, Cin = xf.shape
    T, _, c2p = w_taps.shape

    scratch = () if T == 1 else (pltpu.VMEM((tm, c2p), jnp.float32),)

    # --- VMEM budget (accounting for lane/sublane padding & double buffering) ---
    def pad2(r, c, itemsize, sub):
        return _round_up(r, sub) * _round_up(c, 128) * itemsize

    resident_bufs = 1 if _SINGLE_BUFFER_RESIDENT else 2
    need = (2 * pad2(Lx, Cin, 2, 16)                   # activation (double-buffered)
            + resident_bufs * T * pad2(Cin, c2p, 2, 16)  # weight slabs
            + resident_bufs * pad2(1, c2p, 4, 8)         # BN shift
            + 2 * pad2(tm, c2p, 2, 16)                  # bf16 output (double-buffered)
            + (0 if T == 1 else pad2(tm, c2p, 4, 8))    # f32 accumulator
            + (2 << 20))                                # compiler scratch headroom
    try:
        cap = int(pltpu.get_tpu_info().vmem_capacity_bytes)
    except Exception:
        cap = 64 << 20                                  # conservative (v7x per-TC)
    vmem_limit = int(min(max(need, 32 << 20), int(cap * 0.9)))
    # TODO(synk): if `need` > budget (large images on v7x), switch the activation to
    #             banded, haloed M-tiles via manual make_async_copy double buffering.

    cost = pl.CostEstimate(
        flops=int(2 * N * n_m * tm * T * Cin * c2p),
        transcendentals=int(N * n_m * tm * c2p),
        bytes_accessed=int(N * Lx * Cin * 2 + T * Cin * c2p * 2 + c2p * 4
                           + N * n_m * tm * c2p * 2),
    )

    kernel = functools.partial(_conv_bn_silu_kernel, taps=taps, tm=tm)
    return pl.pallas_call(
        kernel,
        out_shape=jax.ShapeDtypeStruct((N, n_m * tm, c2p), jnp.bfloat16),
        grid_spec=pltpu.PrefetchScalarGridSpec(
            num_scalar_prefetch=0,
            grid=(N, n_m),
            in_specs=[
                # whole (flattened, padded) image stays resident across the M tiles
                pl.BlockSpec((1, Lx, Cin), lambda n, m: (n, 0, 0)),
                _resident_spec((T, Cin, c2p), lambda n, m: (0, 0, 0)),
                _resident_spec((1, c2p), lambda n, m: (0, 0)),
            ],
            out_specs=pl.BlockSpec((1, tm, c2p), lambda n, m: (n, m, 0)),
            scratch_shapes=scratch,
        ),
        compiler_params=pltpu.CompilerParams(
            dimension_semantics=("parallel", "parallel"),
            vmem_limit_bytes=vmem_limit,
        ),
        cost_estimate=cost,
    )(xf, w_taps, shift_p)


# -------------------------------------- JAX glue --------------------------------------
def conv_forward(x, weight, gamma, beta, running_mean, running_var, *,
                 k, s=1, p=None, g=1, eps=1e-3, tm=512, out_dtype=jnp.float32):
    """Conv2d(bias=False, stride=s, pad=autopad) + BatchNorm2d(eval, eps) + SiLU.

    x: (N, C1, H, W) NCHW float32.  Returns NCHW in `out_dtype`.
    Pass out_dtype=jnp.bfloat16 when chaining layers to skip the final cast pass.
    """
    if g != 1:
        # TODO(synk): grouped / depthwise convolutions are not implemented.
        raise NotImplementedError("groups != 1 is not supported")
    p = autopad(k, p)
    N, C1, H, W = x.shape
    C2, c1w, kh, kw = weight.shape
    assert c1w == C1 and kh == k and kw == k
    hp, wp = H + 2 * p, W + 2 * p
    ho = (hp - kh) // s + 1
    wo = (wp - kw) // s + 1
    KK = kh * kw

    # --- BN folding (inference form): scale into the weight, shift in the epilogue ---
    scale = gamma / jnp.sqrt(running_var + eps)
    shift = beta - running_mean * scale
    c2p = _round_up(C2, 128)
    shift_p = jnp.pad(shift, (0, c2p - C2)).reshape(1, c2p).astype(jnp.float32)

    # --- activation: NCHW -> spatially padded NHWC, bf16 ---
    xh = jnp.transpose(x, (0, 2, 3, 1))
    xh = jnp.pad(xh, ((0, 0), (p, p), (p, p), (0, 0))).astype(jnp.bfloat16)

    merge_taps = KK * C1 <= 256   # stem-style layers: tiny C1 starves the MXU per tap

    if merge_taps:
        # Fold all k*k taps into the contraction dim (K = k*k*C1).  Host-side tap
        # concat is cheap for tiny C1; stride is handled in the gather so only the
        # strided output rows are ever computed / stored.
        cols = []
        for dy in range(kh):
            for dx in range(kw):
                cols.append(xh[:, dy:dy + (ho - 1) * s + 1:s,
                               dx:dx + (wo - 1) * s + 1:s, :])
        A = jnp.concatenate(cols, axis=-1).reshape(N, ho * wo, KK * C1)
        m1 = ho * wo
        tm_eff = min(tm, _round_up(m1, 8))
        n_m = pl.cdiv(m1, tm_eff)
        xf = jnp.pad(A, ((0, 0), (0, n_m * tm_eff - m1), (0, 0)))
        w_mat = jnp.transpose(weight, (2, 3, 1, 0)).reshape(KK * C1, C2) * scale[None, :]
        w_taps = jnp.pad(w_mat, ((0, 0), (0, c2p - C2))
                         ).astype(jnp.bfloat16).reshape(1, KK * C1, c2p)
        taps = ((0, 0),)
    else:
        # 1x activation traffic: in-kernel tap loop.  Stride handled by a
        # space-to-phase decomposition (s*s phase images) so every tap is a
        # contiguous flat window; the phase row pitch is padded to a multiple of 8
        # so dy tap offsets stay sublane-aligned.
        hps = -(-hp // s)
        wps_raw = -(-wp // s)
        wps = _round_up(wps_raw, 8)
        m1 = ho * wps
        tm_eff = min(tm, _round_up(m1, 8))
        n_m = pl.cdiv(m1, tm_eff)
        halo = ((kh - 1) // s) * wps + (kw - 1) // s
        lseg = _round_up(max(n_m * tm_eff + halo, hps * wps), 8)
        xe = jnp.pad(xh, ((0, 0), (0, hps * s - hp), (0, wps_raw * s - wp), (0, 0)))
        segs = []
        for py in range(s):
            for px in range(s):
                ph = xe[:, py::s, px::s, :]                      # (N, hps, wps_raw, C1)
                ph = jnp.pad(ph, ((0, 0), (0, 0), (0, wps - wps_raw), (0, 0)))
                ph = ph.reshape(N, hps * wps, C1)
                segs.append(jnp.pad(ph, ((0, 0), (0, lseg - hps * wps), (0, 0))))
        xf = jnp.concatenate(segs, axis=1)                       # (N, s*s*lseg, C1)
        wt = jnp.transpose(weight, (2, 3, 1, 0)).reshape(KK, C1, C2) * scale[None, None, :]
        w_taps = jnp.pad(wt, ((0, 0), (0, 0), (0, c2p - C2))).astype(jnp.bfloat16)
        taps = tuple((((dy % s) * s + (dx % s)) * lseg + (dy // s) * wps, dx // s)
                     for dy in range(kh) for dx in range(kw))

    out = _fused_conv_bn_silu(xf, w_taps, shift_p, taps=taps, tm=tm_eff, n_m=n_m)

    if merge_taps:
        out = out[:, :m1, :C2].reshape(N, ho, wo, C2)
    else:
        out = out[:, :m1, :C2].reshape(N, ho, wps, C2)[:, :, :wo, :]
    out = jnp.transpose(out, (0, 3, 1, 2))                       # NCHW
    return out.astype(out_dtype)


# ----------------------------------------- main -----------------------------------------
if __name__ == "__main__":
    def reference(x, weight, gamma, beta, mean, var, k, s, p, eps, quantize):
        scale = gamma / jnp.sqrt(var + eps)
        shift = beta - mean * scale
        if quantize:  # same bf16 quantization of the matmul operands as the kernel
            xq = x.astype(jnp.bfloat16).astype(jnp.float32)
            wq = (weight * scale[:, None, None, None]).astype(jnp.bfloat16).astype(jnp.float32)
            y = jax.lax.conv_general_dilated(
                xq, wq, (s, s), [(p, p), (p, p)],
                dimension_numbers=("NCHW", "OIHW", "NCHW"))
            y = y + shift.reshape(1, -1, 1, 1)
        else:
            y = jax.lax.conv_general_dilated(
                x, weight, (s, s), [(p, p), (p, p)],
                dimension_numbers=("NCHW", "OIHW", "NCHW"))
            y = y * scale.reshape(1, -1, 1, 1) + shift.reshape(1, -1, 1, 1)
        return y * jax.nn.sigmoid(y)

    EPS = 1e-3
    configs = [
        dict(N=2, C1=4,  C2=8,  H=16, W=16, k=3, s=1, wstd=0.10),  # merged-tap path
        dict(N=2, C1=4,  C2=8,  H=16, W=16, k=3, s=2, wstd=0.10),  # merged-tap, stride 2
        dict(N=1, C1=64, C2=64, H=8,  W=8,  k=3, s=1, wstd=0.05),  # tap-loop path
        dict(N=1, C1=64, C2=64, H=8,  W=8,  k=3, s=2, wstd=0.05),  # tap-loop, stride 2
    ]

    key = jax.random.PRNGKey(0)
    for cfg in configs:
        key, kx, kw_, kg, kb, km, kv = jax.random.split(key, 7)
        N, C1, C2, H, W = cfg["N"], cfg["C1"], cfg["C2"], cfg["H"], cfg["W"]
        K_SZ, STRIDE = cfg["k"], cfg["s"]
        PAD = autopad(K_SZ)

        x = jax.random.normal(kx, (N, C1, H, W), dtype=jnp.float32)
        weight = cfg["wstd"] * jax.random.normal(kw_, (C2, C1, K_SZ, K_SZ), jnp.float32)
        gamma = 1.0 + 0.1 * jax.random.normal(kg, (C2,), jnp.float32)
        beta = 0.1 * jax.random.normal(kb, (C2,), jnp.float32)
        running_mean = 0.1 * jax.random.normal(km, (C2,), jnp.float32)
        running_var = jnp.abs(1.0 + 0.1 * jax.random.normal(kv, (C2,), jnp.float32))

        fwd = jax.jit(functools.partial(conv_forward, k=K_SZ, s=STRIDE, p=PAD, eps=EPS))
        y = fwd(x, weight, gamma, beta, running_mean, running_var)
        jax.block_until_ready(y)

        ho = (H + 2 * PAD - K_SZ) // STRIDE + 1
        wo = (W + 2 * PAD - K_SZ) // STRIDE + 1
        assert y.shape == (N, C2, ho, wo), (y.shape, (N, C2, ho, wo))

        # Reference 1 (tight): same bf16 quantization of the matmul operands.
        ref_q = reference(x, weight, gamma, beta, running_mean, running_var,
                          K_SZ, STRIDE, PAD, EPS, quantize=True)
        err_q = float(jnp.max(jnp.abs(y - ref_q)))
        assert jnp.allclose(y, ref_q, atol=3e-2, rtol=3e-2), (cfg, err_q)

        # Reference 2 (loose): full-f32 PyTorch semantics (kernel uses bf16 operands/out).
        ref_f = reference(x, weight, gamma, beta, running_mean, running_var,
                          K_SZ, STRIDE, PAD, EPS, quantize=False)
        err_f = float(jnp.max(jnp.abs(y - ref_f)))
        assert jnp.allclose(y, ref_f, atol=8e-2, rtol=8e-2), (cfg, err_f)

    print("KERNEL_OK")
</pallas_src>

<mosaic_0001>
module attributes {stable_mosaic.version = 11 : i64} {
  func.func @_copy(%arg0: i32, %arg1: memref<8x128xf32, #tpu.memory_space<vmem>>, %arg2: memref<8x128xf32, #tpu.memory_space<vmem>>) attributes {dimension_semantics = [#tpu.dimension_semantics<arbitrary>], iteration_bounds = array<i64: 1>, scalar_prefetch = 0 : i64, scratch_operands = 0 : i64, tpu.core_type = #tpu.core_type<tc>, window_params = [{pipeline_mode = #tpu.pipeline_mode<synchronous>, transform_indices = @transform_0, window_bounds = array<i64: 8, 128>}, {pipeline_mode = #tpu.pipeline_mode<synchronous>, transform_indices = @transform_1, window_bounds = array<i64: 8, 128>}]} {
    %c0 = arith.constant 0 : index
    %c0_0 = arith.constant 0 : index
    %0 = vector.load %arg1[%c0, %c0_0] : memref<8x128xf32, #tpu.memory_space<vmem>>, vector<8x128xf32>
    %c0_1 = arith.constant 0 : index
    %c0_2 = arith.constant 0 : index
    %1 = vector.load %arg2[%c0_1, %c0_2] : memref<8x128xf32, #tpu.memory_space<vmem>>, vector<8x128xf32>
    tpu.vector_store %arg2[%c0_1, %c0_2], %0 {strides = array<i32>} : memref<8x128xf32, #tpu.memory_space<vmem>>, vector<8x128xf32>,
    return
  }
  func.func @transform_0(%arg0: i32) -> (i32, i32) {
    %c0_i32 = arith.constant 0 : i32
    %c0_i32_0 = arith.constant 0 : i32
    %c0_i32_1 = arith.constant 0 : i32
    return %c0_i32, %c0_i32_0 : i32, i32
  }
  func.func @transform_1(%arg0: i32) -> (i32, i32) {
    %c0_i32 = arith.constant 0 : i32
    %c0_i32_0 = arith.constant 0 : i32
    %c0_i32_1 = arith.constant 0 : i32
    return %c0_i32, %c0_i32_0 : i32, i32
  }
}

module attributes {stable_mosaic.version = 11 : i64} {
  func.func @_conv_bn_silu_kernel(%arg0: i32, %arg1: i32, %arg2: memref<1x256x36xbf16, #tpu.memory_space<vmem>>, %arg3: memref<1x36x128xbf16, #tpu.memory_space<vmem>>, %arg4: memref<1x128xf32, #tpu.memory_space<vmem>>, %arg5: memref<1x256x128xbf16, #tpu.memory_space<vmem>>) attributes {dimension_semantics = [#tpu.dimension_semantics<parallel>, #tpu.dimension_semantics<parallel>], iteration_bounds = array<i64: 2, 1>, scalar_prefetch = 0 : i64, scratch_operands = 0 : i64, tpu.core_type = #tpu.core_type<tc>, window_params = [{transform_indices = @transform_0, window_bounds = array<i64: 1, 256, 36>}, {pipeline_mode = #tpu.pipeline_mode<synchronous>, transform_indices = @transform_1, window_bounds = array<i64: 1, 36, 128>}, {pipeline_mode = #tpu.pipeline_mode<synchronous>, transform_indices = @transform_2, window_bounds = array<i64: 1, 128>}, {transform_indices = @transform_3, window_bounds = array<i64: 1, 256, 128>}]} {
    %c256_i32 = arith.constant 256 : i32
    %0 = arith.muli %arg1, %c256_i32 : i32
    %1 = tpu.assume_multiple %0, 8 : i32
    %c0_i32 = arith.constant 0 : i32
    %2 = arith.addi %1, %c0_i32 : i32
    %3 = tpu.assume_multiple %2, 8 : i32
    %c0_i32_0 = arith.constant 0 : i32
    %4 = arith.addi %3, %c0_i32_0 : i32
    %c0 = arith.constant 0 : index
    %5 = arith.index_cast %4 : i32 to index
    %c0_1 = arith.constant 0 : index
    %6 = vector.load %arg2[%c0, %5, %c0_1] : memref<1x256x36xbf16, #tpu.memory_space<vmem>>, vector<1x256x36xbf16>
    %7 = vector.shape_cast %6 : vector<1x256x36xbf16> to vector<256x36xbf16>
    %c0_2 = arith.constant 0 : index
    %c0_3 = arith.constant 0 : index
    %c0_4 = arith.constant 0 : index
    %8 = vector.load %arg3[%c0_2, %c0_3, %c0_4] : memref<1x36x128xbf16, #tpu.memory_space<vmem>>, vector<1x36x128xbf16>
    %9 = vector.shape_cast %8 : vector<1x36x128xbf16> to vector<36x128xbf16>
    %cst = arith.constant dense<0.000000e+00> : vector<256x128xf32>
    %10 = tpu.matmul %7, %9, %cst {dimension_numbers = #tpu.dot_dimension_numbers<[1], [0], [0], [1], [0, 0, 1, 1], [], []>} : vector<256x36xbf16>, vector<36x128xbf16>, vector<256x128xf32> -> vector<256x128xf32>
    %c0_5 = arith.constant 0 : index
    %c0_6 = arith.constant 0 : index
    %11 = vector.load %arg4[%c0_5, %c0_6] : memref<1x128xf32, #tpu.memory_space<vmem>>, vector<1x128xf32>
    %12 = vector.broadcast %11 : vector<1x128xf32> to vector<256x128xf32>
    %13 = arith.addf %10, %12 : vector<256x128xf32>
    %cst_7 = arith.constant 0.000000e+00 : f32
    %14 = vector.broadcast %cst_7 : f32 to vector<256x128xf32>
    %15 = arith.subf %14, %13 : vector<256x128xf32>
    %16 = math.exp %15 : vector<256x128xf32>
    %cst_8 = arith.constant 1.000000e+00 : f32
    %17 = vector.broadcast %cst_8 : f32 to vector<256x128xf32>
    %18 = arith.addf %17, %16 : vector<256x128xf32>
    %19 = tpu.reciprocal %18 {approx = true} : vector<256x128xf32> -> vector<256x128xf32>
    %20 = arith.mulf %13, %19 : vector<256x128xf32>
    %21 = arith.truncf %20 : vector<256x128xf32> to vector<256x128xbf16>
    %c0_9 = arith.constant 0 : index
    %c0_10 = arith.constant 0 : index
    %c0_11 = arith.constant 0 : index
    %22 = vector.load %arg5[%c0_9, %c0_10, %c0_11] : memref<1x256x128xbf16, #tpu.memory_space<vmem>>, vector<1x256x128xbf16>
    %23 = vector.shape_cast %22 : vector<1x256x128xbf16> to vector<256x128xbf16>
    %24 = vector.shape_cast %21 : vector<256x128xbf16> to vector<1x256x128xbf16>
    tpu.vector_store %arg5[%c0_9, %c0_10, %c0_11], %24 {strides = array<i32>} : memref<1x256x128xbf16, #tpu.memory_space<vmem>>, vector<1x256x128xbf16>,
    return
  }
  func.func @transform_0(%arg0: i32, %arg1: i32) -> (i32, i32, i32) {
    %c0_i32 = arith.constant 0 : i32
    %c0_i32_0 = arith.constant 0 : i32
    %c0_i32_1 = arith.constant 0 : i32
    return %arg0, %c0_i32, %c0_i32_0 : i32, i32, i32
  }
  func.func @transform_1(%arg0: i32, %arg1: i32) -> (i32, i32, i32) {
    %c0_i32 = arith.constant 0 : i32
    %c0_i32_0 = arith.constant 0 : i32
    %c0_i32_1 = arith.constant 0 : i32
    %c0_i32_2 = arith.constant 0 : i32
    return %c0_i32, %c0_i32_0, %c0_i32_1 : i32, i32, i32
  }
  func.func @transform_2(%arg0: i32, %arg1: i32) -> (i32, i32) {
    %c0_i32 = arith.constant 0 : i32
    %c0_i32_0 = arith.constant 0 : i32
    %c0_i32_1 = arith.constant 0 : i32
    return %c0_i32, %c0_i32_0 : i32, i32
  }
  func.func @transform_3(%arg0: i32, %arg1: i32) -> (i32, i32, i32) {
    %c0_i32 = arith.constant 0 : i32
    %c0_i32_0 = arith.constant 0 : i32
    return %arg0, %arg1, %c0_i32 : i32, i32, i32
  }
}

</mosaic_0001>

<llo_original>
// kernel: tpu_custom_call.1
$region0: #{tpu_custom_call.1}
  #allocation0 [shape = 'u32[]', space=smem, size = 0x4, offset = 0x4, fixed_abs, tag = 'smem constant byte address 0x4 - core index']
  #allocation1 [shape = 'u32[144,128]{1,0:T(1,128)}', space=vmem, size = 0x12000, scoped, tag = 'internal scratch']
  %s0 = inlined_call_operand.hbm [shape: f32[8,128], index: 0, kind: input, shape index: {}]
  %s1 = inlined_call_operand.hbm [shape: f32[8,128], index: 1, kind: output, shape index: {}]
  %s2 = sld [smem:[#allocation0]]
  $region18: #{tpu_custom_call.1} parent=0
    _
  %s4 = ssub.s32 1, %s2
  %s5 = scalar_select 0, %s4, %s2
  $region1: #{tpu_custom_call.1} parent=0
    #allocation2 [shape = 'u8[4096]{0}', space=vmem, size = 0x1000, scoped, tag = 'input window, operand 0, single buffered']
    #allocation3 [shape = 's32[1]{0}', space=sflag, size = 0x4, scoped, tag = 'scoped memory for tpu_custom_call.1']
    #allocation4 [shape = 's32[1]{0}', space=sflag, size = 0x4, scoped, tag = 'scoped memory for tpu_custom_call.1']
    #allocation5 [shape = 'u8[4096]{0}', space=vmem, size = 0x1000, scoped, tag = 'output window, operand 0, single buffered']
    %6 = vsyncpa [#allocation3], 0
    %7 = vsyncpa [#allocation4], 0
    // Predicated region
    $region2: #{tpu_custom_call.1} parent=1 // pred_check
      _
    $region3: #{tpu_custom_call.1} parent=1 // pred_check_branch
      %9 = sbr.rel (0) target = $region5
    $region4: #{tpu_custom_call.1} parent=1 // pred_region
      %s11 = ssub.s32 128, 128
      %12 = vsyncadd [#allocation3], %s11
      %s14 = sshll.u32 [#allocation2], 4
      %s15 = int_to_ptr.vmem [resolvable:$true] %s14
      %17 = dma.hbm_to_vmem [thread:$0]  %s0, 128, %s15, [#allocation3]
    $region5: #{tpu_custom_call.1} parent=1 // pred_fallthru
      _
    // Predicated region
    $region6: #{tpu_custom_call.1} parent=1 // pred_check
      _
    $region7: #{tpu_custom_call.1} parent=1 // pred_check_branch
      %19 = sbr.rel (0) target = $region9
    $region8: #{tpu_custom_call.1} parent=1 // pred_region
      %20 = dma.done [#allocation3], 128
    $region9: #{tpu_custom_call.1} parent=1 // pred_fallthru
      _
    %v21 = vld [vmem:[#allocation2] sm:$0xff]
    %22 = vst [vmem:[#allocation5] sm:$0xff] %v21
    // Predicated region
    $region10: #{tpu_custom_call.1} parent=1 // pred_check
      _
    $region11: #{tpu_custom_call.1} parent=1 // pred_check_branch
      %24 = sbr.rel (0) target = $region13
    $region12: #{tpu_custom_call.1} parent=1 // pred_region
      %s26 = ssub.s32 128, 128
      %27 = vsyncadd [#allocation4], %s26
      %s29 = sshll.u32 [#allocation5], 4
      %s30 = int_to_ptr.vmem [resolvable:$true] %s29
      %32 = dma.vmem_to_hbm [thread:$0]  %s30, 128, %s1, [#allocation4]
    $region13: #{tpu_custom_call.1} parent=1 // pred_fallthru
      _
    // Predicated region
    $region14: #{tpu_custom_call.1} parent=1 // pred_check
      _
    $region15: #{tpu_custom_call.1} parent=1 // pred_check_branch
      %34 = sbr.rel (0) target = $region17
    $region16: #{tpu_custom_call.1} parent=1 // pred_region
      %35 = dma.done [#allocation4], 128
    $region17: #{tpu_custom_call.1} parent=1 // pred_fallthru
      _
    %36 = vsyncpa [#allocation3], 1
    %37 = vsyncpa [#allocation4], 1

// kernel: conv_forward.1
$region0: #{conv_forward.1}
  #allocation0 [shape = 'u32[]', space=smem, size = 0x4, offset = 0x4, fixed_abs, tag = 'smem constant byte address 0x4 - core index']
  #allocation1 [shape = 'u32[144,128]{1,0:T(1,128)}', space=vmem, size = 0x12000, scoped, tag = 'internal scratch']
  %s0 = inlined_call_operand.vmem [shape: bf16[2,256,36], index: 0, kind: input, shape index: {}]
  %s1 = inlined_call_operand.vmem [shape: bf16[1,36,128], index: 1, kind: input, shape index: {}]
  %s2 = inlined_call_operand.vmem [shape: f32[1,128], index: 2, kind: input, shape index: {}]
  %s3 = inlined_call_operand.vmem [shape: bf16[2,256,128], index: 3, kind: output, shape index: {}]
  %s4 = sld [smem:[#allocation0]]
  $region45: #{conv_forward.1} parent=0
    _
  %s6 = ssub.s32 1, %s4
  %s7 = scalar_select 0, %s6, %s4
  loop: start=0, step=1, limit=4
  $region2: #{conv_forward.1} parent=0 // loop_pre_header
    _
  $region3: #{conv_forward.1} parent=0 // loop_header
    %s9 = sphi 0, %s13
    %p10 = scmp.ge.s32.totalorder %s9, 4
    %s16 = sphi 0, %s28
    %s17 = sphi 0, %s24
    %s18 = sphi 0, %s16
    %s19 = sphi 0, %s17
    %s20 = sphi 0, %s18
    %s21 = sphi 0, %s19
    %s31 = sphi 0, %s33
    %s34 = sphi 0, %s31
    %s35 = sphi 0, %s34
    %s51 = sphi 0, %s35
    %s55 = sphi 0, %s55
    %s57 = sphi 0, %s55
    %s58 = sphi 0, %s57
    %s72 = sphi 0, %s58
    %s76 = sphi 0, %s76
    %s78 = sphi 0, %s76
    %s79 = sphi 0, %s78
    %s93 = sphi 0, %s79
    %s101 = sphi 0, %s103
    %s104 = sphi 0, %s101
    %s105 = sphi 0, %s104
    %s121 = sphi 0, %s105
  $region4: #{conv_forward.1} parent=0 // loop_header_branch
    %12 = sbr.rel (%p10) target = $region8
  $region5: #{conv_forward.1} parent=0 // loop_body
    %s14 = ssub.s32 %s9, 1
    %s15 = ssub.s32 %s9, 2
    %s22 = sadd.s32 1, %s17
    %p23 = scmp.ge.s32.totalorder %s22, 1
    %s24 = scalar_select %p23, 0, %s22
    %s25 = sadd.s32 1, %s16
    %s26 = scalar_select %p23, %s25, %s16
    %p27 = scmp.ge.s32.totalorder %s26, 2
    %s28 = scalar_select %p27, 0, %s26
    %s29 = ssub.s32 %s16, %s28
    %p30 = scmp.eq.s32.totalorder %s29, 0
    %s32 = sadd.s32 %s31, 1
    %s33 = scalar_select %p30, %s31, %s32
    %p36 = pneg %p30
    %p37 = scmp.eq.s32.totalorder %s9, 1
    %p38 = por %p36, %p37
    %p39 = scmp.ne.s32.totalorder %s31, %s34
    %p40 = scmp.eq.s32.totalorder %s9, 0
    %p41 = por %p39, %p40
    %p42 = scmp.ne.s32.totalorder %s31, %s34
    %p43 = scmp.eq.s32.totalorder %s14, 1
    %p44 = por %p42, %p43
    %p45 = scmp.ne.s32.totalorder %s34, %s35
    %p46 = scmp.eq.s32.totalorder %s14, 0
    %p47 = por %p45, %p46
    %p48 = scmp.ne.s32.totalorder %s34, %s35
    %p49 = scmp.eq.s32.totalorder %s15, 1
    %p50 = por %p48, %p49
    %p52 = scmp.ne.s32.totalorder %s35, %s51
    %p53 = scmp.eq.s32.totalorder %s15, 0
    %p54 = por %p52, %p53
    %s56 = sadd.s32 %s55, 1
    %p59 = scmp.eq.s32.totalorder %s9, 1
    %p60 = scmp.ne.s32.totalorder %s55, %s57
    %p61 = scmp.eq.s32.totalorder %s9, 0
    %p62 = por %p60, %p61
    %p63 = scmp.ne.s32.totalorder %s55, %s57
    %p64 = scmp.eq.s32.totalorder %s14, 1
    %p65 = por %p63, %p64
    %p66 = scmp.ne.s32.totalorder %s57, %s58
    %p67 = scmp.eq.s32.totalorder %s14, 0
    %p68 = por %p66, %p67
    %p69 = scmp.ne.s32.totalorder %s57, %s58
    %p70 = scmp.eq.s32.totalorder %s15, 1
    %p71 = por %p69, %p70
    %p73 = scmp.ne.s32.totalorder %s58, %s72
    %p74 = scmp.eq.s32.totalorder %s15, 0
    %p75 = por %p73, %p74
    %s77 = sadd.s32 %s76, 1
    %p80 = scmp.eq.s32.totalorder %s9, 1
    %p81 = scmp.ne.s32.totalorder %s76, %s78
    %p82 = scmp.eq.s32.totalorder %s9, 0
    %p83 = por %p81, %p82
    %p84 = scmp.ne.s32.totalorder %s76, %s78
    %p85 = scmp.eq.s32.totalorder %s14, 1
    %p86 = por %p84, %p85
    %p87 = scmp.ne.s32.totalorder %s78, %s79
    %p88 = scmp.eq.s32.totalorder %s14, 0
    %p89 = por %p87, %p88
    %p90 = scmp.ne.s32.totalorder %s78, %s79
    %p91 = scmp.eq.s32.totalorder %s15, 1
    %p92 = por %p90, %p91
    %p94 = scmp.ne.s32.totalorder %s79, %s93
    %p95 = scmp.eq.s32.totalorder %s15, 0
    %p96 = por %p94, %p95
    %s97 = ssub.s32 %s16, %s28
    %s98 = ssub.s32 %s17, %s24
    %s99 = sor.u32 %s97, %s98
    %p100 = scmp.eq.s32.totalorder %s99, 0
    %s102 = sadd.s32 %s101, 1
    %s103 = scalar_select %p100, %s101, %s102
    %p106 = pneg %p100
    %p107 = scmp.eq.s32.totalorder %s9, 1
    %p108 = por %p106, %p107
    %p109 = scmp.ne.s32.totalorder %s101, %s104
    %p110 = scmp.eq.s32.totalorder %s9, 0
    %p111 = por %p109, %p110
    %p112 = scmp.ne.s32.totalorder %s101, %s104
    %p113 = scmp.eq.s32.totalorder %s14, 1
    %p114 = por %p112, %p113
    %p115 = scmp.ne.s32.totalorder %s104, %s105
    %p116 = scmp.eq.s32.totalorder %s14, 0
    %p117 = por %p115, %p116
    %p118 = scmp.ne.s32.totalorder %s104, %s105
    %p119 = scmp.eq.s32.totalorder %s15, 1
    %p120 = por %p118, %p119
    %p122 = scmp.ne.s32.totalorder %s105, %s121
    %p123 = scmp.eq.s32.totalorder %s15, 0
    %p124 = por %p122, %p123
    %p125 = scmp.le.s32.totalorder 1, %s9
    %p126 = scmp.lt.s32.totalorder %s9, 3
    %p127 = pnand %p125, %p126
    %p128 = pneg %p127
    // Predicated region
    $region9: #{conv_forward.1} parent=5 // pred_check
      _
    $region10: #{conv_forward.1} parent=5 // pred_check_branch
      %130 = sbr.rel (%p127) target = $region12
    $region11: #{conv_forward.1} parent=5 // pred_region
      %s131 = ssub.s32 %s9, 1
      // Predicated region
      $region13: #{conv_forward.1} parent=11 // pred_check
        %p132 = pneg %p68
      $region14: #{conv_forward.1} parent=11 // pred_check_branch
        %134 = sbr.rel (%p132) target = $region16
      $region15: #{conv_forward.1} parent=11 // pred_region
        _
      $region16: #{conv_forward.1} parent=11 // pred_fallthru
        _
      // Predicated region
      $region17: #{conv_forward.1} parent=11 // pred_check
        %p135 = pneg %p89
      $region18: #{conv_forward.1} parent=11 // pred_check_branch
        %137 = sbr.rel (%p135) target = $region20
      $region19: #{conv_forward.1} parent=11 // pred_region
        _
      $region20: #{conv_forward.1} parent=11 // pred_fallthru
        _
    $region12: #{conv_forward.1} parent=5 // pred_fallthru
      _
    %p138 = scmp.lt.s32.totalorder %s9, 2
    // Predicated region
    $region21: #{conv_forward.1} parent=5 // pred_check
      %p139 = pneg %p138
    $region22: #{conv_forward.1} parent=5 // pred_check_branch
      %141 = sbr.rel (%p139) target = $region24
    $region23: #{conv_forward.1} parent=5 // pred_region
      // Predicated region
      $region25: #{conv_forward.1} parent=23 // pred_check
        %p142 = pneg %p41
      $region26: #{conv_forward.1} parent=23 // pred_check_branch
        %144 = sbr.rel (%p142) target = $region28
      $region27: #{conv_forward.1} parent=23 // pred_region
        %p145 = scmp.lt.s32.totalorder %s16, 1
        %s146 = scalar_select %p145, %s16, 1
        %s147 = smul.addr %s146, 32
        %s148 = smul.addr %s147, 4
        %s149 = scalar_lea.vmem %s0, %s148
      $region28: #{conv_forward.1} parent=23 // pred_fallthru
        _
    $region24: #{conv_forward.1} parent=5 // pred_fallthru
      _
    %p150 = scmp.le.s32.totalorder 1, %s9
    %p151 = scmp.lt.s32.totalorder %s9, 3
    %p152 = pnand %p150, %p151
    %p153 = pneg %p152
    // Predicated region
    $region29: #{conv_forward.1} parent=5 // pred_check
      _
    $region30: #{conv_forward.1} parent=5 // pred_check_branch
      %155 = sbr.rel (%p152) target = $region32
    $region31: #{conv_forward.1} parent=5 // pred_region
      %s156 = ssub.s32 %s9, 1
      %p157 = scmp.lt.s32.totalorder %s18, 1
      %s158 = scalar_select %p157, %s18, 1
      %s159 = smul.addr %s158, 32
      %s160 = smul.addr %s159, 4
      %s161 = scalar_lea.vmem %s0, %s160
      %p162 = pneg %p47
      %p163 = pneg %p44
      %p164 = pneg %p68
      %p165 = pneg %p65
      %p166 = pneg %p89
      %p167 = pneg %p86
      %p168 = pneg %p117
      %p169 = pneg %p114
      %s170 = smul.u32 32, %s19
      %p171 = scmp.lt.s32.totalorder %s18, 1
      %s172 = scalar_select %p171, %s18, 1
      %p173 = scmp.lt.s32.totalorder %s170, 31
      %s174 = scalar_select %p173, %s170, 31
      %s175 = smul.addr %s172, 32
      %s176 = sadd.s32 %s174, %s175
      %s177 = smul.addr %s176, 4
      %s178 = scalar_lea.vmem %s3, %s177
      %p179 = scmp.lt.s32.totalorder %s18, 1
      %s180 = scalar_select %p179, %s18, 1
      %s181 = smul.addr %s180, 32
      %s182 = smul.addr %s181, 4
      %s183 = scalar_lea.vmem %s0, %s182
      %s184 = smul.u32 32, %s19
      %p185 = scmp.lt.s32.totalorder %s18, 1
      %s186 = scalar_select %p185, %s18, 1
      %p187 = scmp.lt.s32.totalorder %s184, 31
      %s188 = scalar_select %p187, %s184, 31
      %s189 = smul.addr %s186, 32
      %s190 = sadd.s32 %s188, %s189
      %s191 = smul.addr %s190, 4
      %s192 = scalar_lea.vmem %s3, %s191
      %s193 = smul.u32 32, %s19
      %s195 = smul.u32 %s19, 256
      %s196 = sshra.s32 %s195, 3
      %s197 = sand.u32 %s195, 7
      %s198 = smul.addr %s196, 4
      %s199 = scalar_lea.vmem %s183, %s198
      %v200 = vld [vmem:[%s199] sm:$0xf]
      %v201 = vld [vmem:[%s199 + $0x4] sm:$0xf]
      %v202 = vld [vmem:[%s199 + $0x8] sm:$0xf]
      %v203 = vld [vmem:[%s199 + $0xc] sm:$0xf]
      %v204 = vld [vmem:[%s199 + $0x10] sm:$0xf]
      %v205 = vld [vmem:[%s199 + $0x14] sm:$0xf]
      %v206 = vld [vmem:[%s199 + $0x18] sm:$0xf]
      %v207 = vld [vmem:[%s199 + $0x1c] sm:$0xf]
      %v208 = vld [vmem:[%s199 + $0x20] sm:$0xf]
      %v209 = vld [vmem:[%s199 + $0x24] sm:$0xf]
      %v210 = vld [vmem:[%s199 + $0x28] sm:$0xf]
      %v211 = vld [vmem:[%s199 + $0x2c] sm:$0xf]
      %v212 = vld [vmem:[%s199 + $0x30] sm:$0xf]
      %v213 = vld [vmem:[%s199 + $0x34] sm:$0xf]
      %v214 = vld [vmem:[%s199 + $0x38] sm:$0xf]
      %v215 = vld [vmem:[%s199 + $0x3c] sm:$0xf]
      %v216 = vld [vmem:[%s199 + $0x40] sm:$0xf]
      %v217 = vld [vmem:[%s199 + $0x44] sm:$0xf]
      %v218 = vld [vmem:[%s199 + $0x48] sm:$0xf]
      %v219 = vld [vmem:[%s199 + $0x4c] sm:$0xf]
      %v220 = vld [vmem:[%s199 + $0x50] sm:$0xf]
      %v221 = vld [vmem:[%s199 + $0x54] sm:$0xf]
      %v222 = vld [vmem:[%s199 + $0x58] sm:$0xf]
      %v223 = vld [vmem:[%s199 + $0x5c] sm:$0xf]
      %v224 = vld [vmem:[%s199 + $0x60] sm:$0xf]
      %v225 = vld [vmem:[%s199 + $0x64] sm:$0xf]
      %v226 = vld [vmem:[%s199 + $0x68] sm:$0xf]
      %v227 = vld [vmem:[%s199 + $0x6c] sm:$0xf]
      %v228 = vld [vmem:[%s199 + $0x70] sm:$0xf]
      %v229 = vld [vmem:[%s199 + $0x74] sm:$0xf]
      %v230 = vld [vmem:[%s199 + $0x78] sm:$0xf]
      %v231 = vld [vmem:[%s199 + $0x7c] sm:$0xf]
      %v232 = vld [vmem:[%s1] sm:$0xf]
      %v233 = vld [vmem:[%s1 + $0x4] sm:$0xf]
      %v234 = vld [vmem:[%s1 + $0x8] sm:$0xf]
      %v235 = vld [vmem:[%s1 + $0xc] sm:$0xf]
      %v236 = vld [vmem:[%s1 + $0x10] sm:$0x3]
      %v237 = vld [vmem:[%s2] sm:$0x1]
      %v239 = vlaneseq
      %v240 = vshrl.u32 %v239, 7
      %v241 = vsub.s32 0, %v240
      %v242 = vrot.slane %v237, %v241
      %v276 = vunpack.c.l.b16 %v200
      %v277 = vunpack.c.l.b16 %v201
      %v278 = vunpack.c.l.b16 %v202
      %v279 = vunpack.c.l.b16 %v203
      %v280 = vunpack.c.l.b16 %v204
      %v281 = vunpack.c.l.b16 %v205
      %v282 = vunpack.c.l.b16 %v206
      %v283 = vunpack.c.l.b16 %v207
      %v284 = vunpack.c.l.b16 %v208
      %v285 = vunpack.c.l.b16 %v209
      %v286 = vunpack.c.l.b16 %v210
      %v287 = vunpack.c.l.b16 %v211
      %v288 = vunpack.c.l.b16 %v212
      %v289 = vunpack.c.l.b16 %v213
      %v290 = vunpack.c.l.b16 %v214
      %v291 = vunpack.c.l.b16 %v215
      %v292 = vunpack.c.l.b16 %v216
      %v293 = vunpack.c.l.b16 %v217
      %v294 = vunpack.c.l.b16 %v218
      %v295 = vunpack.c.l.b16 %v219
      %v296 = vunpack.c.l.b16 %v220
      %v297 = vunpack.c.l.b16 %v221
      %v298 = vunpack.c.l.b16 %v222
      %v299 = vunpack.c.l.b16 %v223
      %v300 = vunpack.c.l.b16 %v224
      %v301 = vunpack.c.l.b16 %v225
      %v302 = vunpack.c.l.b16 %v226
      %v303 = vunpack.c.l.b16 %v227
      %v304 = vunpack.c.l.b16 %v228
      %v305 = vunpack.c.l.b16 %v229
      %v306 = vunpack.c.l.b16 %v230
      %v307 = vunpack.c.l.b16 %v231
      %v308 = vpack.c.b16 %v277, %v276
      %v309 = vpack.c.b16 %v279, %v278
      %v310 = vpack.c.b16 %v281, %v280
      %v311 = vpack.c.b16 %v283, %v282
      %v312 = vpack.c.b16 %v285, %v284
      %v313 = vpack.c.b16 %v287, %v286
      %v314 = vpack.c.b16 %v289, %v288
      %v315 = vpack.c.b16 %v291, %v290
      %v316 = vpack.c.b16 %v293, %v292
      %v317 = vpack.c.b16 %v295, %v294
      %v318 = vpack.c.b16 %v297, %v296
      %v319 = vpack.c.b16 %v299, %v298
      %v320 = vpack.c.b16 %v301, %v300
      %v321 = vpack.c.b16 %v303, %v302
      %v322 = vpack.c.b16 %v305, %v304
      %v323 = vpack.c.b16 %v307, %v306
      %v329 = vunpack.c.l.b16 %v232
      %v330 = vunpack.c.l.b16 %v233
      %v331 = vunpack.c.l.b16 %v234
      %v332 = vunpack.c.l.b16 %v235
      %v333 = vunpack.c.l.b16 %v236
      %v334 = vpack.c.b16 %v330, %v329
      %v335 = vpack.c.b16 %v332, %v331
      %v336 = vpack.c.b16 %v333, %v333
      %vm339 = vcmask 293888
      %v341 = vsel %vm339, %v308, 0
      %v344 = vsel %vm339, %v309, 0
      %v347 = vsel %vm339, %v310, 0
      %v350 = vsel %vm339, %v311, 0
      %v353 = vsel %vm339, %v312, 0
      %v356 = vsel %vm339, %v313, 0
      %v359 = vsel %vm339, %v314, 0
      %v362 = vsel %vm339, %v315, 0
      %v365 = vsel %vm339, %v316, 0
      %v368 = vsel %vm339, %v317, 0
      %v371 = vsel %vm339, %v318, 0
      %v374 = vsel %vm339, %v319, 0
      %v377 = vsel %vm339, %v320, 0
      %v380 = vsel %vm339, %v321, 0
      %v383 = vsel %vm339, %v322, 0
      %v386 = vsel %vm339, %v323, 0
      %vm388 = vcmask 1041408
      %v390 = vsel %vm388, %v336, 0
      %392 = vmatprep.subr.bf16.mxu0 0
      %393 = vmatpush1.bf16.msra.mxu0 %v334
      %394 = vmatprep.subr.bf16.mxu0 0
      %395 = vmatpush1.bf16.msra.mxu0 %v335
      %396 = vmatprep.subr.bf16.mxu0 0
      %397 = vmatpush1.bf16.msra.mxu0 %v390
      %398 = vmatprep.subr.bf16.mxu0 0
      %399 = vmatpush1.bf16.msra.mxu0 0
      %400 = vmatprep.subr.bf16.mxu0 0
      %401 = vmatpush1.bf16.msra.mxu0 0
      %402 = vmatprep.subr.bf16.mxu0 0
      %403 = vmatpush1.bf16.msra.mxu0 0
      %404 = vmatprep.subr.bf16.mxu0 0
      %405 = vmatpush1.bf16.msra.mxu0 0
      %406 = vmatprep.subr.bf16.mxu0 0
      %407 = vmatpush1.bf16.msra.mxu0 0
      %408 = vmatprep.subr.bf16.mxu0 0
      %409 = vmatpush1.bf16.msra.mxu0 0
      %410 = vmatprep.subr.bf16.mxu0 0
      %411 = vmatpush1.bf16.msra.mxu0 0
      %412 = vmatprep.subr.bf16.mxu0 0
      %413 = vmatpush1.bf16.msra.mxu0 0
      %414 = vmatprep.subr.bf16.mxu0 0
      %415 = vmatpush1.bf16.msra.mxu0 0
      %416 = vmatprep.subr.bf16.mxu0 0
      %417 = vmatpush1.bf16.msra.mxu0 0
      %418 = vmatprep.subr.bf16.mxu0 0
      %419 = vmatpush1.bf16.msra.mxu0 0
      %420 = vmatprep.subr.bf16.mxu0 0
      %421 = vmatpush1.bf16.msra.mxu0 0
      %422 = vmatprep.subr.bf16.mxu0 0
      %423 = vmatpush1.bf16.msra.mxu0 0
      %424 = vmatprep.mubr.bf16.mxu0 0
      %425 = vmatmul.mubr.bf16.gmra.mrb[0].mxu0 %v341
      %v426 = vpop.f32.mrb[0].mxu0
      %v427 = vadd.f32 %v242, %v426
      %v428 = vpop.f32.mrb[0].mxu0
      %v429 = vpop.f32.mrb[0].mxu0
      %v430 = vadd.f32 %v242, %v429
      %v431 = vpop.f32.mrb[0].mxu0
      %432 = vmatprep.mubr.bf16.mxu0 0
      %433 = vmatmul.mubr.bf16.gmra.mrb[0].mxu0 %v344
      %v434 = vpop.f32.mrb[0].mxu0
      %v435 = vadd.f32 %v242, %v434
      %v436 = vpop.f32.mrb[0].mxu0
      %v437 = vpop.f32.mrb[0].mxu0
      %v438 = vadd.f32 %v242, %v437
      %v439 = vpop.f32.mrb[0].mxu0
      %440 = vmatprep.mubr.bf16.mxu0 0
      %441 = vmatmul.mubr.bf16.gmra.mrb[0].mxu0 %v347
      %v442 = vpop.f32.mrb[0].mxu0
      %v443 = vadd.f32 %v242, %v442
      %v444 = vpop.f32.mrb[0].mxu0
      %v445 = vpop.f32.mrb[0].mxu0
      %v446 = vadd.f32 %v242, %v445
      %v447 = vpop.f32.mrb[0].mxu0
      %448 = vmatprep.mubr.bf16.mxu0 0
      %449 = vmatmul.mubr.bf16.gmra.mrb[0].mxu0 %v350
      %v450 = vpop.f32.mrb[0].mxu0
      %v451 = vadd.f32 %v242, %v450
      %v452 = vpop.f32.mrb[0].mxu0
      %v453 = vpop.f32.mrb[0].mxu0
      %v454 = vadd.f32 %v242, %v453
      %v455 = vpop.f32.mrb[0].mxu0
      %456 = vmatprep.mubr.bf16.mxu0 0
      %457 = vmatmul.mubr.bf16.gmra.mrb[0].mxu0 %v353
      %v458 = vpop.f32.mrb[0].mxu0
      %v459 = vadd.f32 %v242, %v458
      %v460 = vpop.f32.mrb[0].mxu0
      %v461 = vpop.f32.mrb[0].mxu0
      %v462 = vadd.f32 %v242, %v461
      %v463 = vpop.f32.mrb[0].mxu0
      %464 = vmatprep.mubr.bf16.mxu0 0
      %465 = vmatmul.mubr.bf16.gmra.mrb[0].mxu0 %v356
      %v466 = vpop.f32.mrb[0].mxu0
      %v467 = vadd.f32 %v242, %v466
      %v468 = vpop.f32.mrb[0].mxu0
      %v469 = vpop.f32.mrb[0].mxu0
      %v470 = vadd.f32 %v242, %v469
      %v471 = vpop.f32.mrb[0].mxu0
      %472 = vmatprep.mubr.bf16.mxu0 0
      %473 = vmatmul.mubr.bf16.gmra.mrb[0].mxu0 %v359
      %v474 = vpop.f32.mrb[0].mxu0
      %v475 = vadd.f32 %v242, %v474
      %v476 = vpop.f32.mrb[0].mxu0
      %v477 = vpop.f32.mrb[0].mxu0
      %v478 = vadd.f32 %v242, %v477
      %v479 = vpop.f32.mrb[0].mxu0
      %480 = vmatprep.mubr.bf16.mxu0 0
      %481 = vmatmul.mubr.bf16.gmra.mrb[0].mxu0 %v362
      %v482 = vpop.f32.mrb[0].mxu0
      %v483 = vadd.f32 %v242, %v482
      %v484 = vpop.f32.mrb[0].mxu0
      %v485 = vpop.f32.mrb[0].mxu0
      %v486 = vadd.f32 %v242, %v485
      %v487 = vpop.f32.mrb[0].mxu0
      %488 = vmatprep.mubr.bf16.mxu0 0
      %489 = vmatmul.mubr.bf16.gmra.mrb[0].mxu0 %v365
      %v490 = vpop.f32.mrb[0].mxu0
      %v491 = vadd.f32 %v242, %v490
      %v492 = vpop.f32.mrb[0].mxu0
      %v493 = vpop.f32.mrb[0].mxu0
      %v494 = vadd.f32 %v242, %v493
      %v495 = vpop.f32.mrb[0].mxu0
      %496 = vmatprep.mubr.bf16.mxu0 0
      %497 = vmatmul.mubr.bf16.gmra.mrb[0].mxu0 %v368
      %v498 = vpop.f32.mrb[0].mxu0
      %v499 = vadd.f32 %v242, %v498
      %v500 = vpop.f32.mrb[0].mxu0
      %v501 = vpop.f32.mrb[0].mxu0
      %v502 = vadd.f32 %v242, %v501
      %v503 = vpop.f32.mrb[0].mxu0
      %504 = vmatprep.mubr.bf16.mxu0 0
      %505 = vmatmul.mubr.bf16.gmra.mrb[0].mxu0 %v371
      %v506 = vpop.f32.mrb[0].mxu0
      %v507 = vadd.f32 %v242, %v506
      %v508 = vpop.f32.mrb[0].mxu0
      %v509 = vpop.f32.mrb[0].mxu0
      %v510 = vadd.f32 %v242, %v509
      %v511 = vpop.f32.mrb[0].mxu0
      %512 = vmatprep.mubr.bf16.mxu0 0
      %513 = vmatmul.mubr.bf16.gmra.mrb[0].mxu0 %v374
      %v514 = vpop.f32.mrb[0].mxu0
      %v515 = vadd.f32 %v242, %v514
      %v516 = vpop.f32.mrb[0].mxu0
      %v517 = vpop.f32.mrb[0].mxu0
      %v518 = vadd.f32 %v242, %v517
      %v519 = vpop.f32.mrb[0].mxu0
      %520 = vmatprep.mubr.bf16.mxu0 0
      %521 = vmatmul.mubr.bf16.gmra.mrb[0].mxu0 %v377
      %v522 = vpop.f32.mrb[0].mxu0
      %v523 = vadd.f32 %v242, %v522
      %v524 = vpop.f32.mrb[0].mxu0
      %v525 = vpop.f32.mrb[0].mxu0
      %v526 = vadd.f32 %v242, %v525
      %v527 = vpop.f32.mrb[0].mxu0
      %528 = vmatprep.mubr.bf16.mxu0 0
      %529 = vmatmul.mubr.bf16.gmra.mrb[0].mxu0 %v380
      %v530 = vpop.f32.mrb[0].mxu0
      %v531 = vadd.f32 %v242, %v530
      %v532 = vpop.f32.mrb[0].mxu0
      %v533 = vpop.f32.mrb[0].mxu0
      %v534 = vadd.f32 %v242, %v533
      %v535 = vpop.f32.mrb[0].mxu0
      %536 = vmatprep.mubr.bf16.mxu0 0
      %537 = vmatmul.mubr.bf16.gmra.mrb[0].mxu0 %v383
      %v538 = vpop.f32.mrb[0].mxu0
      %v539 = vadd.f32 %v242, %v538
      %v540 = vpop.f32.mrb[0].mxu0
      %v541 = vpop.f32.mrb[0].mxu0
      %v542 = vadd.f32 %v242, %v541
      %v543 = vpop.f32.mrb[0].mxu0
      %544 = vmatprep.mubr.bf16.mxu0 0
      %545 = vmatmul.mubr.bf16.gmra.mrb[0].mxu0 %v386
      %v546 = vpop.f32.mrb[0].mxu0
      %v547 = vadd.f32 %v242, %v546
      %v548 = vpop.f32.mrb[0].mxu0
      %v549 = vpop.f32.mrb[0].mxu0
      %v550 = vadd.f32 %v242, %v549
      %v551 = vpop.f32.mrb[0].mxu0
      %552 = vdwg.mxu0
      %v553 = vsub.f32 0.0, %v427
      %v554 = vsub.f32 0.0, %v430
      %v555 = vsub.f32 0.0, %v435
      %v556 = vsub.f32 0.0, %v438
      %v557 = vsub.f32 0.0, %v443
      %v558 = vsub.f32 0.0, %v446
      %v559 = vsub.f32 0.0, %v451
      %v560 = vsub.f32 0.0, %v454
      %v561 = vsub.f32 0.0, %v459
      %v562 = vsub.f32 0.0, %v462
      %v563 = vsub.f32 0.0, %v467
      %v564 = vsub.f32 0.0, %v470
      %v565 = vsub.f32 0.0, %v475
      %v566 = vsub.f32 0.0, %v478
      %v567 = vsub.f32 0.0, %v483
      %v568 = vsub.f32 0.0, %v486
      %v569 = vsub.f32 0.0, %v491
      %v570 = vsub.f32 0.0, %v494
      %v571 = vsub.f32 0.0, %v499
      %v572 = vsub.f32 0.0, %v502
      %v573 = vsub.f32 0.0, %v507
      %v574 = vsub.f32 0.0, %v510
      %v575 = vsub.f32 0.0, %v515
      %v576 = vsub.f32 0.0, %v518
      %v577 = vsub.f32 0.0, %v523
      %v578 = vsub.f32 0.0, %v526
      %v579 = vsub.f32 0.0, %v531
      %v580 = vsub.f32 0.0, %v534
      %v581 = vsub.f32 0.0, %v539
      %v582 = vsub.f32 0.0, %v542
      %v583 = vsub.f32 0.0, %v547
      %v584 = vsub.f32 0.0, %v550
      %v585 = vmul.f32 %v553, 1.442695
      %v586 = vpow.pop %v585
      %v587 = vmul.f32 %v554, 1.442695
      %v588 = vpow.pop %v587
      %v589 = vmul.f32 %v555, 1.442695
      %v590 = vpow.pop %v589
      %v591 = vmul.f32 %v556, 1.442695
      %v592 = vpow.pop %v591
      %v593 = vmul.f32 %v557, 1.442695
      %v594 = vpow.pop %v593
      %v595 = vmul.f32 %v558, 1.442695
      %v596 = vpow.pop %v595
      %v597 = vmul.f32 %v559, 1.442695
      %v598 = vpow.pop %v597
      %v599 = vmul.f32 %v560, 1.442695
      %v600 = vpow.pop %v599
      %v601 = vmul.f32 %v561, 1.442695
      %v602 = vpow.pop %v601
      %v603 = vmul.f32 %v562, 1.442695
      %v604 = vpow.pop %v603
      %v605 = vmul.f32 %v563, 1.442695
      %v606 = vpow.pop %v605
      %v607 = vmul.f32 %v564, 1.442695
      %v608 = vpow.pop %v607
      %v609 = vmul.f32 %v565, 1.442695
      %v610 = vpow.pop %v609
      %v611 = vmul.f32 %v566, 1.442695
      %v612 = vpow.pop %v611
      %v613 = vmul.f32 %v567, 1.442695
      %v614 = vpow.pop %v613
      %v615 = vmul.f32 %v568, 1.442695
      %v616 = vpow.pop %v615
      %v617 = vmul.f32 %v569, 1.442695
      %v618 = vpow.pop %v617
      %v619 = vmul.f32 %v570, 1.442695
      %v620 = vpow.pop %v619
      %v621 = vmul.f32 %v571, 1.442695
      %v622 = vpow.pop %v621
      %v623 = vmul.f32 %v572, 1.442695
      %v624 = vpow.pop %v623
      %v625 = vmul.f32 %v573, 1.442695
      %v626 = vpow.pop %v625
      %v627 = vmul.f32 %v574, 1.442695
      %v628 = vpow.pop %v627
      %v629 = vmul.f32 %v575, 1.442695
      %v630 = vpow.pop %v629
      %v631 = vmul.f32 %v576, 1.442695
      %v632 = vpow.pop %v631
      %v633 = vmul.f32 %v577, 1.442695
      %v634 = vpow.pop %v633
      %v635 = vmul.f32 %v578, 1.442695
      %v636 = vpow.pop %v635
      %v637 = vmul.f32 %v579, 1.442695
      %v638 = vpow.pop %v637
      %v639 = vmul.f32 %v580, 1.442695
      %v640 = vpow.pop %v639
      %v641 = vmul.f32 %v581, 1.442695
      %v642 = vpow.pop %v641
      %v643 = vmul.f32 %v582, 1.442695
      %v644 = vpow.pop %v643
      %v645 = vmul.f32 %v583, 1.442695
      %v646 = vpow.pop %v645
      %v647 = vmul.f32 %v584, 1.442695
      %v648 = vpow.pop %v647
      %v649 = vadd.f32 %v586, 1.0
      %v650 = vadd.f32 %v588, 1.0
      %v651 = vadd.f32 %v590, 1.0
      %v652 = vadd.f32 %v592, 1.0
      %v653 = vadd.f32 %v594, 1.0
      %v654 = vadd.f32 %v596, 1.0
      %v655 = vadd.f32 %v598, 1.0
      %v656 = vadd.f32 %v600, 1.0
      %v657 = vadd.f32 %v602, 1.0
      %v658 = vadd.f32 %v604, 1.0
      %v659 = vadd.f32 %v606, 1.0
      %v660 = vadd.f32 %v608, 1.0
      %v661 = vadd.f32 %v610, 1.0
      %v662 = vadd.f32 %v612, 1.0
      %v663 = vadd.f32 %v614, 1.0
      %v664 = vadd.f32 %v616, 1.0
      %v665 = vadd.f32 %v618, 1.0
      %v666 = vadd.f32 %v620, 1.0
      %v667 = vadd.f32 %v622, 1.0
      %v668 = vadd.f32 %v624, 1.0
      %v669 = vadd.f32 %v626, 1.0
      %v670 = vadd.f32 %v628, 1.0
      %v671 = vadd.f32 %v630, 1.0
      %v672 = vadd.f32 %v632, 1.0
      %v673 = vadd.f32 %v634, 1.0
      %v674 = vadd.f32 %v636, 1.0
      %v675 = vadd.f32 %v638, 1.0
      %v676 = vadd.f32 %v640, 1.0
      %v677 = vadd.f32 %v642, 1.0
      %v678 = vadd.f32 %v644, 1.0
      %v679 = vadd.f32 %v646, 1.0
      %v680 = vadd.f32 %v648, 1.0
      %v681 = vrcp.pop %v649
      %v682 = vrcp.pop %v650
      %v683 = vrcp.pop %v651
      %v684 = vrcp.pop %v652
      %v685 = vrcp.pop %v653
      %v686 = vrcp.pop %v654
      %v687 = vrcp.pop %v655
      %v688 = vrcp.pop %v656
      %v689 = vrcp.pop %v657
      %v690 = vrcp.pop %v658
      %v691 = vrcp.pop %v659
      %v692 = vrcp.pop %v660
      %v693 = vrcp.pop %v661
      %v694 = vrcp.pop %v662
      %v695 = vrcp.pop %v663
      %v696 = vrcp.pop %v664
      %v697 = vrcp.pop %v665
      %v698 = vrcp.pop %v666
      %v699 = vrcp.pop %v667
      %v700 = vrcp.pop %v668
      %v701 = vrcp.pop %v669
      %v702 = vrcp.pop %v670
      %v703 = vrcp.pop %v671
      %v704 = vrcp.pop %v672
      %v705 = vrcp.pop %v673
      %v706 = vrcp.pop %v674
      %v707 = vrcp.pop %v675
      %v708 = vrcp.pop %v676
      %v709 = vrcp.pop %v677
      %v710 = vrcp.pop %v678
      %v711 = vrcp.pop %v679
      %v712 = vrcp.pop %v680
      %v713 = vmul.f32 %v427, %v681
      %v714 = vmul.f32 %v430, %v682
      %v715 = vmul.f32 %v435, %v683
      %v716 = vmul.f32 %v438, %v684
      %v717 = vmul.f32 %v443, %v685
      %v718 = vmul.f32 %v446, %v686
      %v719 = vmul.f32 %v451, %v687
      %v720 = vmul.f32 %v454, %v688
      %v721 = vmul.f32 %v459, %v689
      %v722 = vmul.f32 %v462, %v690
      %v723 = vmul.f32 %v467, %v691
      %v724 = vmul.f32 %v470, %v692
      %v725 = vmul.f32 %v475, %v693
      %v726 = vmul.f32 %v478, %v694
      %v727 = vmul.f32 %v483, %v695
      %v728 = vmul.f32 %v486, %v696
      %v729 = vmul.f32 %v491, %v697
      %v730 = vmul.f32 %v494, %v698
      %v731 = vmul.f32 %v499, %v699
      %v732 = vmul.f32 %v502, %v700
      %v733 = vmul.f32 %v507, %v701
      %v734 = vmul.f32 %v510, %v702
      %v735 = vmul.f32 %v515, %v703
      %v736 = vmul.f32 %v518, %v704
      %v737 = vmul.f32 %v523, %v705
      %v738 = vmul.f32 %v526, %v706
      %v739 = vmul.f32 %v531, %v707
      %v740 = vmul.f32 %v534, %v708
      %v741 = vmul.f32 %v539, %v709
      %v742 = vmul.f32 %v542, %v710
      %v743 = vmul.f32 %v547, %v711
      %v744 = vmul.f32 %v550, %v712
      %v745 = vpack.c.bf16 %v714, %v713
      %v746 = vpack.c.bf16 %v716, %v715
      %v747 = vpack.c.bf16 %v718, %v717
      %v748 = vpack.c.bf16 %v720, %v719
      %v749 = vpack.c.bf16 %v722, %v721
      %v750 = vpack.c.bf16 %v724, %v723
      %v751 = vpack.c.bf16 %v726, %v725
      %v752 = vpack.c.bf16 %v728, %v727
      %v753 = vpack.c.bf16 %v730, %v729
      %v754 = vpack.c.bf16 %v732, %v731
      %v755 = vpack.c.bf16 %v734, %v733
      %v756 = vpack.c.bf16 %v736, %v735
      %v757 = vpack.c.bf16 %v738, %v737
      %v758 = vpack.c.bf16 %v740, %v739
      %v759 = vpack.c.bf16 %v742, %v741
      %v760 = vpack.c.bf16 %v744, %v743
      %v777 = vunpack.c.l.b16 %v745
      %v778 = vunpack.c.h.b16 %v745
      %v779 = vunpack.c.l.b16 %v746
      %v780 = vunpack.c.h.b16 %v746
      %v781 = vunpack.c.l.b16 %v747
      %v782 = vunpack.c.h.b16 %v747
      %v783 = vunpack.c.l.b16 %v748
      %v784 = vunpack.c.h.b16 %v748
      %v785 = vunpack.c.l.b16 %v749
      %v786 = vunpack.c.h.b16 %v749
      %v787 = vunpack.c.l.b16 %v750
      %v788 = vunpack.c.h.b16 %v750
      %v789 = vunpack.c.l.b16 %v751
      %v790 = vunpack.c.h.b16 %v751
      %v791 = vunpack.c.l.b16 %v752
      %v792 = vunpack.c.h.b16 %v752
      %v793 = vunpack.c.l.b16 %v753
      %v794 = vunpack.c.h.b16 %v753
      %v795 = vunpack.c.l.b16 %v754
      %v796 = vunpack.c.h.b16 %v754
      %v797 = vunpack.c.l.b16 %v755
      %v798 = vunpack.c.h.b16 %v755
      %v799 = vunpack.c.l.b16 %v756
      %v800 = vunpack.c.h.b16 %v756
      %v801 = vunpack.c.l.b16 %v757
      %v802 = vunpack.c.h.b16 %v757
      %v803 = vunpack.c.l.b16 %v758
      %v804 = vunpack.c.h.b16 %v758
      %v805 = vunpack.c.l.b16 %v759
      %v806 = vunpack.c.h.b16 %v759
      %v807 = vunpack.c.l.b16 %v760
      %v808 = vunpack.c.h.b16 %v760
      %v809 = vpack.c.b16 %v777, %v777
      %v810 = vpack.c.b16 %v778, %v778
      %v811 = vpack.c.b16 %v779, %v779
      %v812 = vpack.c.b16 %v780, %v780
      %v813 = vpack.c.b16 %v781, %v781
      %v814 = vpack.c.b16 %v782, %v782
      %v815 = vpack.c.b16 %v783, %v783
      %v816 = vpack.c.b16 %v784, %v784
      %v817 = vpack.c.b16 %v785, %v785
      %v818 = vpack.c.b16 %v786, %v786
      %v819 = vpack.c.b16 %v787, %v787
      %v820 = vpack.c.b16 %v788, %v788
      %v821 = vpack.c.b16 %v789, %v789
      %v822 = vpack.c.b16 %v790, %v790
      %v823 = vpack.c.b16 %v791, %v791
      %v824 = vpack.c.b16 %v792, %v792
      %v825 = vpack.c.b16 %v793, %v793
      %v826 = vpack.c.b16 %v794, %v794
      %v827 = vpack.c.b16 %v795, %v795
      %v828 = vpack.c.b16 %v796, %v796
      %v829 = vpack.c.b16 %v797, %v797
      %v830 = vpack.c.b16 %v798, %v798
      %v831 = vpack.c.b16 %v799, %v799
      %v832 = vpack.c.b16 %v800, %v800
      %v833 = vpack.c.b16 %v801, %v801
      %v834 = vpack.c.b16 %v802, %v802
      %v835 = vpack.c.b16 %v803, %v803
      %v836 = vpack.c.b16 %v804, %v804
      %v837 = vpack.c.b16 %v805, %v805
      %v838 = vpack.c.b16 %v806, %v806
      %v839 = vpack.c.b16 %v807, %v807
      %v840 = vpack.c.b16 %v808, %v808
      %873 = vst [vmem:[%s192] sm:$0xf] %v809
      %874 = vst [vmem:[%s192 + $0x4] sm:$0xf] %v810
      %875 = vst [vmem:[%s192 + $0x8] sm:$0xf] %v811
      %876 = vst [vmem:[%s192 + $0xc] sm:$0xf] %v812
      %877 = vst [vmem:[%s192 + $0x10] sm:$0xf] %v813
      %878 = vst [vmem:[%s192 + $0x14] sm:$0xf] %v814
      %879 = vst [vmem:[%s192 + $0x18] sm:$0xf] %v815
      %880 = vst [vmem:[%s192 + $0x1c] sm:$0xf] %v816
      %881 = vst [vmem:[%s192 + $0x20] sm:$0xf] %v817
      %882 = vst [vmem:[%s192 + $0x24] sm:$0xf] %v818
      %883 = vst [vmem:[%s192 + $0x28] sm:$0xf] %v819
      %884 = vst [vmem:[%s192 + $0x2c] sm:$0xf] %v820
      %885 = vst [vmem:[%s192 + $0x30] sm:$0xf] %v821
      %886 = vst [vmem:[%s192 + $0x34] sm:$0xf] %v822
      %887 = vst [vmem:[%s192 + $0x38] sm:$0xf] %v823
      %888 = vst [vmem:[%s192 + $0x3c] sm:$0xf] %v824
      %889 = vst [vmem:[%s192 + $0x40] sm:$0xf] %v825
      %890 = vst [vmem:[%s192 + $0x44] sm:$0xf] %v826
      %891 = vst [vmem:[%s192 + $0x48] sm:$0xf] %v827
      %892 = vst [vmem:[%s192 + $0x4c] sm:$0xf] %v828
      %893 = vst [vmem:[%s192 + $0x50] sm:$0xf] %v829
      %894 = vst [vmem:[%s192 + $0x54] sm:$0xf] %v830
      %895 = vst [vmem:[%s192 + $0x58] sm:$0xf] %v831
      %896 = vst [vmem:[%s192 + $0x5c] sm:$0xf] %v832
      %897 = vst [vmem:[%s192 + $0x60] sm:$0xf] %v833
      %898 = vst [vmem:[%s192 + $0x64] sm:$0xf] %v834
      %899 = vst [vmem:[%s192 + $0x68] sm:$0xf] %v835
      %900 = vst [vmem:[%s192 + $0x6c] sm:$0xf] %v836
      %901 = vst [vmem:[%s192 + $0x70] sm:$0xf] %v837
      %902 = vst [vmem:[%s192 + $0x74] sm:$0xf] %v838
      %903 = vst [vmem:[%s192 + $0x78] sm:$0xf] %v839
      %904 = vst [vmem:[%s192 + $0x7c] sm:$0xf] %v840
      %s905 = smul.u32 32, %s19
      %p906 = scmp.lt.s32.totalorder %s18, 1
      %s907 = scalar_select %p906, %s18, 1
      %p908 = scmp.lt.s32.totalorder %s905, 31
      %s909 = scalar_select %p908, %s905, 31
      %s910 = smul.addr %s907, 32
      %s911 = sadd.s32 %s909, %s910
      %s912 = smul.addr %s911, 4
      %s913 = scalar_lea.vmem %s3, %s912
      // Predicated region
      $region33: #{conv_forward.1} parent=31 // pred_check
        %p914 = pneg %p114
      $region34: #{conv_forward.1} parent=31 // pred_check_branch
        %916 = sbr.rel (%p914) target = $region36
      $region35: #{conv_forward.1} parent=31 // pred_region
        %s917 = smul.u32 32, %s19
      $region36: #{conv_forward.1} parent=31 // pred_fallthru
        _
    $region32: #{conv_forward.1} parent=5 // pred_fallthru
      _
    %p918 = scmp.le.s32.totalorder 2, %s9
    // Predicated region
    $region37: #{conv_forward.1} parent=5 // pred_check
      %p919 = pneg %p918
    $region38: #{conv_forward.1} parent=5 // pred_check_branch
      %921 = sbr.rel (%p919) target = $region40
    $region39: #{conv_forward.1} parent=5 // pred_region
      %s922 = ssub.s32 %s9, 2
      // Predicated region
      $region41: #{conv_forward.1} parent=39 // pred_check
        %p923 = pneg %p120
      $region42: #{conv_forward.1} parent=39 // pred_check_branch
        %925 = sbr.rel (%p923) target = $region44
      $region43: #{conv_forward.1} parent=39 // pred_region
        %s926 = smul.u32 32, %s21
        %p927 = scmp.lt.s32.totalorder %s20, 1
        %s928 = scalar_select %p927, %s20, 1
        %p929 = scmp.lt.s32.totalorder %s926, 31
        %s930 = scalar_select %p929, %s926, 31
        %s931 = smul.addr %s928, 32
        %s932 = sadd.s32 %s930, %s931
        %s933 = smul.addr %s932, 4
        %s934 = scalar_lea.vmem %s3, %s933
      $region44: #{conv_forward.1} parent=39 // pred_fallthru
        _
    $region40: #{conv_forward.1} parent=5 // pred_fallthru
      _
  $region6: #{conv_forward.1} parent=0 // loop_footer
    %s13 = sadd.s32 1, %s9
  $region7: #{conv_forward.1} parent=0 // loop_footer_branch
    %8 = sbr.rel target = $region3
  $region8: #{conv_forward.1} parent=0 // loop_exit
    _

</llo_original>
